<compile_context>
chip_gen: v7x
topology: tpu7x:2x2x1
jax: 0.10.0
libtpu: 0.0.40
codegen_flags: <defaults>
</compile_context>

<pallas_src>
import functools

import jax
import jax.numpy as jnp
from jax.experimental import pallas as pl
from jax.experimental.pallas import tpu as pltpu


def _round_up(x, m):
    return ((x + m - 1) // m) * m


def _conv_matmul_kernel(x_ref, w_ref, b_ref, o_ref):
    """Fused im2col conv block.

    x_ref: (TM, Kp)   bf16 im2col rows (Kp = KH*KW*C padded to 128)
    w_ref: (Kp, OCp)  bf16 weights     (OCp = OC padded to 128)
    b_ref: (1, OCp)   f32 bias row
    o_ref: (TM, OCp)  f32 output (lane-dense, 128-wide last dim)
    """
    acc = jnp.dot(x_ref[...], w_ref[...], preferred_element_type=jnp.float32)
    o_ref[...] = (acc + b_ref[...]).astype(o_ref.dtype)


def conv2d_pallas(x_nhwc, w_hwio, bias, stride, padding):
    """2-D convolution (bias=True) over NHWC images as one fused Pallas matmul."""
    n, h, w, c = x_nhwc.shape
    kh, kw, _, oc = w_hwio.shape
    hp, wp = h + 2 * padding, w + 2 * padding
    oh = (hp - kh) // stride + 1
    ow = (wp - kw) // stride + 1

    # ---- im2col in the wrapper (one XLA relayout); conv math stays in-kernel.
    x_pad = jnp.pad(x_nhwc, ((0, 0), (padding, padding), (padding, padding), (0, 0)))
    taps = []
    for i in range(kh):
        for j in range(kw):
            taps.append(
                x_pad[:, i:i + (oh - 1) * stride + 1:stride,
                      j:j + (ow - 1) * stride + 1:stride, :])
    x_col = jnp.concatenate(taps, axis=-1)             # (N, OH, OW, KH*KW*C), tap-major
    k_dim = kh * kw * c
    m = n * oh * ow
    x_col = x_col.reshape(m, k_dim)

    # (KH, KW, C, OC) -> (KH*KW*C, OC); row order matches the tap-major im2col.
    w_mat = w_hwio.reshape(k_dim, oc)

    # ---- pad contraction & output-channel dims to the 128-lane width.
    k_pad = _round_up(k_dim, 128)
    oc_pad = _round_up(oc, 128)
    x_col = jnp.pad(x_col, ((0, 0), (0, k_pad - k_dim)))
    w_mat = jnp.pad(w_mat, ((0, k_pad - k_dim), (0, oc_pad - oc)))
    b_row = jnp.pad(bias.reshape(1, oc).astype(jnp.float32),
                    ((0, 0), (0, oc_pad - oc)))

    # ---- tile the M (rows) axis into a few big blocks (>=2 feeds both v7x TCs).
    tm = 1024 if m >= 2048 else _round_up(m, 8)
    m_pad = _round_up(m, tm)
    x_col = jnp.pad(x_col, ((0, m_pad - m), (0, 0)))
    grid_m = m_pad // tm

    # bf16 MXU operands; accumulation + bias epilogue stay f32 in the kernel.
    x_col = x_col.astype(jnp.bfloat16)
    w_mat = w_mat.astype(jnp.bfloat16)

    cost = pl.CostEstimate(
        flops=2 * m_pad * k_pad * oc_pad,
        transcendentals=0,
        bytes_accessed=(x_col.size * 2 + w_mat.size * 2
                        + b_row.size * 4 + m_pad * oc_pad * 4),
    )

    out = pl.pallas_call(
        _conv_matmul_kernel,
        out_shape=jax.ShapeDtypeStruct((m_pad, oc_pad), x_nhwc.dtype),
        grid_spec=pltpu.PrefetchScalarGridSpec(
            num_scalar_prefetch=0,
            grid=(grid_m,),
            in_specs=[
                pl.BlockSpec((tm, k_pad), lambda i: (i, 0)),
                pl.BlockSpec((k_pad, oc_pad), lambda i: (0, 0)),
                pl.BlockSpec((1, oc_pad), lambda i: (0, 0)),
            ],
            out_specs=pl.BlockSpec((tm, oc_pad), lambda i: (i, 0)),
        ),
        compiler_params=pltpu.CompilerParams(
            dimension_semantics=("parallel",)),
        cost_estimate=cost,
    )(x_col, w_mat, b_row)

    out = out[:m, :oc]                                  # drop M / OC zero-padding
    return out.reshape(n, oh, ow, oc)


def convin_lstm_forward(inputs, weight_oihw, bias, stride, padding):
    """Matches ConvinLSTM.forward: inputs (S, B, C, H, W) -> (S, B, OC, OH, OW)."""
    s, b, c, h, w = inputs.shape
    x = inputs.reshape(s * b, c, h, w)                  # merge seq & batch
    x_nhwc = jnp.transpose(x, (0, 2, 3, 1))             # NCHW -> NHWC
    w_hwio = jnp.transpose(weight_oihw, (2, 3, 1, 0))   # OIHW -> (KH, KW, C, OC)
    out_nhwc = conv2d_pallas(x_nhwc, w_hwio, bias, stride, padding)
    out = jnp.transpose(out_nhwc, (0, 3, 1, 2))         # NHWC -> NCHW
    n, oc, oh, ow = out.shape
    return out.reshape(s, b, oc, oh, ow)


if __name__ == "__main__":
    # ConvinLSTM(in_channels=4, out_channels=8, kernal_size=3, stride=1, padding=1)
    S, B, C, H, W = 8, 2, 4, 16, 16
    OC, K, STRIDE, PAD = 8, 3, 1, 1

    key = jax.random.PRNGKey(0)
    k_x, k_w, k_b = jax.random.split(key, 3)
    x = jax.random.normal(k_x, (S, B, C, H, W), dtype=jnp.float32)
    # Deterministic synthetic parameters (shapes match nn.Conv2d(C, OC, K, ...)).
    weight = jax.random.normal(k_w, (OC, C, K, K), dtype=jnp.float32) * 0.1
    bias = jax.random.normal(k_b, (OC,), dtype=jnp.float32) * 0.1

    fwd = jax.jit(functools.partial(convin_lstm_forward, stride=STRIDE, padding=PAD))
    out = fwd(x, weight, bias)
    out = jax.block_until_ready(out)

    # Reference: XLA conv on the same bf16-quantized operands (f32 accumulate),
    # so the comparison checks the im2col / tap ordering, not bf16 rounding.
    x_q = x.astype(jnp.bfloat16).astype(jnp.float32).reshape(S * B, C, H, W)
    w_q = weight.astype(jnp.bfloat16).astype(jnp.float32)
    ref = jax.lax.conv_general_dilated(
        x_q, w_q, (STRIDE, STRIDE), ((PAD, PAD), (PAD, PAD)),
        dimension_numbers=("NCHW", "OIHW", "NCHW"),
        precision=jax.lax.Precision.HIGHEST)
    ref = (ref + bias.reshape(1, OC, 1, 1)).reshape(S, B, OC, H, W)

    assert out.shape == (S, B, OC, H, W)
    max_err = float(jnp.max(jnp.abs(out - ref)))
    assert jnp.allclose(out, ref, atol=2e-3, rtol=2e-3), max_err

    print("KERNEL_OK")
</pallas_src>

<mosaic_0001>
module attributes {stable_mosaic.version = 11 : i64} {
  func.func @_conv_matmul_kernel(%arg0: i32, %arg1: memref<1024x128xbf16, #tpu.memory_space<vmem>>, %arg2: memref<128x128xbf16, #tpu.memory_space<vmem>>, %arg3: memref<1x128xf32, #tpu.memory_space<vmem>>, %arg4: memref<1024x128xf32, #tpu.memory_space<vmem>>) attributes {dimension_semantics = [#tpu.dimension_semantics<parallel>], iteration_bounds = array<i64: 4>, scalar_prefetch = 0 : i64, scratch_operands = 0 : i64, tpu.core_type = #tpu.core_type<tc>, window_params = [{transform_indices = @transform_0, window_bounds = array<i64: 1024, 128>}, {pipeline_mode = #tpu.pipeline_mode<synchronous>, transform_indices = @transform_1, window_bounds = array<i64: 128, 128>}, {pipeline_mode = #tpu.pipeline_mode<synchronous>, transform_indices = @transform_2, window_bounds = array<i64: 1, 128>}, {transform_indices = @transform_3, window_bounds = array<i64: 1024, 128>}]} {
    %c0 = arith.constant 0 : index
    %c0_0 = arith.constant 0 : index
    %0 = vector.load %arg1[%c0, %c0_0] : memref<1024x128xbf16, #tpu.memory_space<vmem>>, vector<1024x128xbf16>
    %c0_1 = arith.constant 0 : index
    %c0_2 = arith.constant 0 : index
    %1 = vector.load %arg2[%c0_1, %c0_2] : memref<128x128xbf16, #tpu.memory_space<vmem>>, vector<128x128xbf16>
    %cst = arith.constant dense<0.000000e+00> : vector<1024x128xf32>
    %2 = tpu.matmul %0, %1, %cst {dimension_numbers = #tpu.dot_dimension_numbers<[1], [0], [0], [1], [0, 0, 1, 1], [], []>} : vector<1024x128xbf16>, vector<128x128xbf16>, vector<1024x128xf32> -> vector<1024x128xf32>
    %c0_3 = arith.constant 0 : index
    %c0_4 = arith.constant 0 : index
    %3 = vector.load %arg3[%c0_3, %c0_4] : memref<1x128xf32, #tpu.memory_space<vmem>>, vector<1x128xf32>
    %4 = vector.broadcast %3 : vector<1x128xf32> to vector<1024x128xf32>
    %5 = arith.addf %2, %4 : vector<1024x128xf32>
    %c0_5 = arith.constant 0 : index
    %c0_6 = arith.constant 0 : index
    %6 = vector.load %arg4[%c0_5, %c0_6] : memref<1024x128xf32, #tpu.memory_space<vmem>>, vector<1024x128xf32>
    tpu.vector_store %arg4[%c0_5, %c0_6], %5 {strides = array<i32>} : memref<1024x128xf32, #tpu.memory_space<vmem>>, vector<1024x128xf32>,
    return
  }
  func.func @transform_0(%arg0: i32) -> (i32, i32) {
    %c0_i32 = arith.constant 0 : i32
    %c0_i32_0 = arith.constant 0 : i32
    return %arg0, %c0_i32 : i32, i32
  }
  func.func @transform_1(%arg0: i32) -> (i32, i32) {
    %c0_i32 = arith.constant 0 : i32
    %c0_i32_0 = arith.constant 0 : i32
    %c0_i32_1 = arith.constant 0 : i32
    return %c0_i32, %c0_i32_0 : i32, i32
  }
  func.func @transform_2(%arg0: i32) -> (i32, i32) {
    %c0_i32 = arith.constant 0 : i32
    %c0_i32_0 = arith.constant 0 : i32
    %c0_i32_1 = arith.constant 0 : i32
    return %c0_i32, %c0_i32_0 : i32, i32
  }
  func.func @transform_3(%arg0: i32) -> (i32, i32) {
    %c0_i32 = arith.constant 0 : i32
    %c0_i32_0 = arith.constant 0 : i32
    return %arg0, %c0_i32 : i32, i32
  }
}

</mosaic_0001>

<llo_original>
// kernel: convin_lstm_forward.1
$region0: #{convin_lstm_forward.1}
  #allocation0 [shape = 'u32[]', space=smem, size = 0x4, offset = 0x4, fixed_abs, tag = 'smem constant byte address 0x4 - core index']
  #allocation1 [shape = 'u32[144,128]{1,0:T(1,128)}', space=vmem, size = 0x12000, scoped, tag = 'internal scratch']
  %s0 = inlined_call_operand.vmem [shape: bf16[4096,128], index: 0, kind: input, shape index: {}]
  %s1 = inlined_call_operand.vmem [shape: bf16[128,128], index: 1, kind: input, shape index: {}]
  %s2 = inlined_call_operand.vmem [shape: f32[1,128], index: 2, kind: input, shape index: {}]
  %s3 = inlined_call_operand.vmem [shape: f32[4096,128], index: 3, kind: output, shape index: {}]
  %s4 = sld [smem:[#allocation0]]
  $region45: #{convin_lstm_forward.1} parent=0
    _
  %s6 = ssub.s32 1, %s4
  %s7 = scalar_select 0, %s6, %s4
  loop: start=0, step=1, limit=6
  $region2: #{convin_lstm_forward.1} parent=0 // loop_pre_header
    _
  $region3: #{convin_lstm_forward.1} parent=0 // loop_header
    %s9 = sphi 0, %s13
    %p10 = scmp.ge.s32.totalorder %s9, 6
    %s19 = sphi 0, %s21
    %s22 = sphi 0, %s19
    %s23 = sphi 0, %s22
    %s39 = sphi 0, %s23
    %s43 = sphi 0, %s43
    %s45 = sphi 0, %s43
    %s46 = sphi 0, %s45
    %s60 = sphi 0, %s46
    %s64 = sphi 0, %s64
    %s66 = sphi 0, %s64
    %s67 = sphi 0, %s66
    %s81 = sphi 0, %s67
    %s87 = sphi 0, %s89
    %s90 = sphi 0, %s87
    %s91 = sphi 0, %s90
    %s107 = sphi 0, %s91
  $region4: #{convin_lstm_forward.1} parent=0 // loop_header_branch
    %12 = sbr.rel (%p10) target = $region8
  $region5: #{convin_lstm_forward.1} parent=0 // loop_body
    %s14 = ssub.s32 %s9, 1
    %s15 = ssub.s32 %s9, 2
    %s16 = sadd.s32 %s9, 1
    %s17 = ssub.s32 %s9, %s16
    %p18 = scmp.eq.s32.totalorder %s17, 0
    %s20 = sadd.s32 %s19, 1
    %s21 = scalar_select %p18, %s19, %s20
    %p24 = pneg %p18
    %p25 = scmp.eq.s32.totalorder %s9, 3
    %p26 = por %p24, %p25
    %p27 = scmp.ne.s32.totalorder %s19, %s22
    %p28 = scmp.eq.s32.totalorder %s9, 0
    %p29 = por %p27, %p28
    %p30 = scmp.ne.s32.totalorder %s19, %s22
    %p31 = scmp.eq.s32.totalorder %s14, 3
    %p32 = por %p30, %p31
    %p33 = scmp.ne.s32.totalorder %s22, %s23
    %p34 = scmp.eq.s32.totalorder %s14, 0
    %p35 = por %p33, %p34
    %p36 = scmp.ne.s32.totalorder %s22, %s23
    %p37 = scmp.eq.s32.totalorder %s15, 3
    %p38 = por %p36, %p37
    %p40 = scmp.ne.s32.totalorder %s23, %s39
    %p41 = scmp.eq.s32.totalorder %s15, 0
    %p42 = por %p40, %p41
    %s44 = sadd.s32 %s43, 1
    %p47 = scmp.eq.s32.totalorder %s9, 3
    %p48 = scmp.ne.s32.totalorder %s43, %s45
    %p49 = scmp.eq.s32.totalorder %s9, 0
    %p50 = por %p48, %p49
    %p51 = scmp.ne.s32.totalorder %s43, %s45
    %p52 = scmp.eq.s32.totalorder %s14, 3
    %p53 = por %p51, %p52
    %p54 = scmp.ne.s32.totalorder %s45, %s46
    %p55 = scmp.eq.s32.totalorder %s14, 0
    %p56 = por %p54, %p55
    %p57 = scmp.ne.s32.totalorder %s45, %s46
    %p58 = scmp.eq.s32.totalorder %s15, 3
    %p59 = por %p57, %p58
    %p61 = scmp.ne.s32.totalorder %s46, %s60
    %p62 = scmp.eq.s32.totalorder %s15, 0
    %p63 = por %p61, %p62
    %s65 = sadd.s32 %s64, 1
    %p68 = scmp.eq.s32.totalorder %s9, 3
    %p69 = scmp.ne.s32.totalorder %s64, %s66
    %p70 = scmp.eq.s32.totalorder %s9, 0
    %p71 = por %p69, %p70
    %p72 = scmp.ne.s32.totalorder %s64, %s66
    %p73 = scmp.eq.s32.totalorder %s14, 3
    %p74 = por %p72, %p73
    %p75 = scmp.ne.s32.totalorder %s66, %s67
    %p76 = scmp.eq.s32.totalorder %s14, 0
    %p77 = por %p75, %p76
    %p78 = scmp.ne.s32.totalorder %s66, %s67
    %p79 = scmp.eq.s32.totalorder %s15, 3
    %p80 = por %p78, %p79
    %p82 = scmp.ne.s32.totalorder %s67, %s81
    %p83 = scmp.eq.s32.totalorder %s15, 0
    %p84 = por %p82, %p83
    %s85 = ssub.s32 %s9, %s16
    %p86 = scmp.eq.s32.totalorder %s85, 0
    %s88 = sadd.s32 %s87, 1
    %s89 = scalar_select %p86, %s87, %s88
    %p92 = pneg %p86
    %p93 = scmp.eq.s32.totalorder %s9, 3
    %p94 = por %p92, %p93
    %p95 = scmp.ne.s32.totalorder %s87, %s90
    %p96 = scmp.eq.s32.totalorder %s9, 0
    %p97 = por %p95, %p96
    %p98 = scmp.ne.s32.totalorder %s87, %s90
    %p99 = scmp.eq.s32.totalorder %s14, 3
    %p100 = por %p98, %p99
    %p101 = scmp.ne.s32.totalorder %s90, %s91
    %p102 = scmp.eq.s32.totalorder %s14, 0
    %p103 = por %p101, %p102
    %p104 = scmp.ne.s32.totalorder %s90, %s91
    %p105 = scmp.eq.s32.totalorder %s15, 3
    %p106 = por %p104, %p105
    %p108 = scmp.ne.s32.totalorder %s91, %s107
    %p109 = scmp.eq.s32.totalorder %s15, 0
    %p110 = por %p108, %p109
    %p111 = scmp.le.s32.totalorder 1, %s9
    %p112 = scmp.lt.s32.totalorder %s9, 5
    %p113 = pnand %p111, %p112
    %p114 = pneg %p113
    // Predicated region
    $region9: #{convin_lstm_forward.1} parent=5 // pred_check
      _
    $region10: #{convin_lstm_forward.1} parent=5 // pred_check_branch
      %116 = sbr.rel (%p113) target = $region12
    $region11: #{convin_lstm_forward.1} parent=5 // pred_region
      %s117 = ssub.s32 %s9, 1
      // Predicated region
      $region13: #{convin_lstm_forward.1} parent=11 // pred_check
        %p118 = pneg %p56
      $region14: #{convin_lstm_forward.1} parent=11 // pred_check_branch
        %120 = sbr.rel (%p118) target = $region16
      $region15: #{convin_lstm_forward.1} parent=11 // pred_region
        _
      $region16: #{convin_lstm_forward.1} parent=11 // pred_fallthru
        _
      // Predicated region
      $region17: #{convin_lstm_forward.1} parent=11 // pred_check
        %p121 = pneg %p77
      $region18: #{convin_lstm_forward.1} parent=11 // pred_check_branch
        %123 = sbr.rel (%p121) target = $region20
      $region19: #{convin_lstm_forward.1} parent=11 // pred_region
        _
      $region20: #{convin_lstm_forward.1} parent=11 // pred_fallthru
        _
    $region12: #{convin_lstm_forward.1} parent=5 // pred_fallthru
      _
    %p124 = scmp.lt.s32.totalorder %s9, 4
    // Predicated region
    $region21: #{convin_lstm_forward.1} parent=5 // pred_check
      %p125 = pneg %p124
    $region22: #{convin_lstm_forward.1} parent=5 // pred_check_branch
      %127 = sbr.rel (%p125) target = $region24
    $region23: #{convin_lstm_forward.1} parent=5 // pred_region
      // Predicated region
      $region25: #{convin_lstm_forward.1} parent=23 // pred_check
        %p128 = pneg %p29
      $region26: #{convin_lstm_forward.1} parent=23 // pred_check_branch
        %130 = sbr.rel (%p128) target = $region28
      $region27: #{convin_lstm_forward.1} parent=23 // pred_region
        %s131 = smul.u32 128, %s9
        %p132 = scmp.lt.s32.totalorder %s131, 511
        %s133 = scalar_select %p132, %s131, 511
        %s134 = smul.addr %s133, 4
        %s135 = scalar_lea.vmem %s0, %s134
        %s136 = smul.u32 128, %s9
      $region28: #{convin_lstm_forward.1} parent=23 // pred_fallthru
        _
    $region24: #{convin_lstm_forward.1} parent=5 // pred_fallthru
      _
    %p137 = scmp.le.s32.totalorder 1, %s9
    %p138 = scmp.lt.s32.totalorder %s9, 5
    %p139 = pnand %p137, %p138
    %p140 = pneg %p139
    // Predicated region
    $region29: #{convin_lstm_forward.1} parent=5 // pred_check
      _
    $region30: #{convin_lstm_forward.1} parent=5 // pred_check_branch
      %142 = sbr.rel (%p139) target = $region32
    $region31: #{convin_lstm_forward.1} parent=5 // pred_region
      %s143 = ssub.s32 %s9, 1
      %s144 = smul.u32 128, %s14
      %p145 = scmp.lt.s32.totalorder %s144, 511
      %s146 = scalar_select %p145, %s144, 511
      %s147 = smul.addr %s146, 4
      %s148 = scalar_lea.vmem %s0, %s147
      %p149 = pneg %p35
      %p150 = pneg %p32
      %p151 = pneg %p56
      %p152 = pneg %p53
      %p153 = pneg %p77
      %p154 = pneg %p74
      %p155 = pneg %p103
      %p156 = pneg %p100
      %s157 = smul.u32 128, %s14
      %p158 = scmp.lt.s32.totalorder %s157, 511
      %s159 = scalar_select %p158, %s157, 511
      %s160 = smul.addr %s159, 8
      %s161 = scalar_lea.vmem %s3, %s160
      %s162 = smul.u32 128, %s14
      %p163 = scmp.lt.s32.totalorder %s162, 511
      %s164 = scalar_select %p163, %s162, 511
      %s165 = smul.addr %s164, 4
      %s166 = scalar_lea.vmem %s0, %s165
      %s167 = smul.u32 128, %s14
      %s168 = smul.u32 128, %s14
      %p169 = scmp.lt.s32.totalorder %s168, 511
      %s170 = scalar_select %p169, %s168, 511
      %s171 = smul.addr %s170, 8
      %s172 = scalar_lea.vmem %s3, %s171
      %s173 = smul.u32 128, %s14
      %v175 = vld [vmem:[%s166] sm:$0xf]
      %v176 = vld [vmem:[%s166 + $0x4] sm:$0xf]
      %v177 = vld [vmem:[%s166 + $0x8] sm:$0xf]
      %v178 = vld [vmem:[%s166 + $0xc] sm:$0xf]
      %v179 = vld [vmem:[%s166 + $0x10] sm:$0xf]
      %v180 = vld [vmem:[%s166 + $0x14] sm:$0xf]
      %v181 = vld [vmem:[%s166 + $0x18] sm:$0xf]
      %v182 = vld [vmem:[%s166 + $0x1c] sm:$0xf]
      %v183 = vld [vmem:[%s166 + $0x20] sm:$0xf]
      %v184 = vld [vmem:[%s166 + $0x24] sm:$0xf]
      %v185 = vld [vmem:[%s166 + $0x28] sm:$0xf]
      %v186 = vld [vmem:[%s166 + $0x2c] sm:$0xf]
      %v187 = vld [vmem:[%s166 + $0x30] sm:$0xf]
      %v188 = vld [vmem:[%s166 + $0x34] sm:$0xf]
      %v189 = vld [vmem:[%s166 + $0x38] sm:$0xf]
      %v190 = vld [vmem:[%s166 + $0x3c] sm:$0xf]
      %v191 = vld [vmem:[%s166 + $0x40] sm:$0xf]
      %v192 = vld [vmem:[%s166 + $0x44] sm:$0xf]
      %v193 = vld [vmem:[%s166 + $0x48] sm:$0xf]
      %v194 = vld [vmem:[%s166 + $0x4c] sm:$0xf]
      %v195 = vld [vmem:[%s166 + $0x50] sm:$0xf]
      %v196 = vld [vmem:[%s166 + $0x54] sm:$0xf]
      %v197 = vld [vmem:[%s166 + $0x58] sm:$0xf]
      %v198 = vld [vmem:[%s166 + $0x5c] sm:$0xf]
      %v199 = vld [vmem:[%s166 + $0x60] sm:$0xf]
      %v200 = vld [vmem:[%s166 + $0x64] sm:$0xf]
      %v201 = vld [vmem:[%s166 + $0x68] sm:$0xf]
      %v202 = vld [vmem:[%s166 + $0x6c] sm:$0xf]
      %v203 = vld [vmem:[%s166 + $0x70] sm:$0xf]
      %v204 = vld [vmem:[%s166 + $0x74] sm:$0xf]
      %v205 = vld [vmem:[%s166 + $0x78] sm:$0xf]
      %v206 = vld [vmem:[%s166 + $0x7c] sm:$0xf]
      %v207 = vld [vmem:[%s166 + $0x80] sm:$0xf]
      %v208 = vld [vmem:[%s166 + $0x84] sm:$0xf]
      %v209 = vld [vmem:[%s166 + $0x88] sm:$0xf]
      %v210 = vld [vmem:[%s166 + $0x8c] sm:$0xf]
      %v211 = vld [vmem:[%s166 + $0x90] sm:$0xf]
      %v212 = vld [vmem:[%s166 + $0x94] sm:$0xf]
      %v213 = vld [vmem:[%s166 + $0x98] sm:$0xf]
      %v214 = vld [vmem:[%s166 + $0x9c] sm:$0xf]
      %v215 = vld [vmem:[%s166 + $0xa0] sm:$0xf]
      %v216 = vld [vmem:[%s166 + $0xa4] sm:$0xf]
      %v217 = vld [vmem:[%s166 + $0xa8] sm:$0xf]
      %v218 = vld [vmem:[%s166 + $0xac] sm:$0xf]
      %v219 = vld [vmem:[%s166 + $0xb0] sm:$0xf]
      %v220 = vld [vmem:[%s166 + $0xb4] sm:$0xf]
      %v221 = vld [vmem:[%s166 + $0xb8] sm:$0xf]
      %v222 = vld [vmem:[%s166 + $0xbc] sm:$0xf]
      %v223 = vld [vmem:[%s166 + $0xc0] sm:$0xf]
      %v224 = vld [vmem:[%s166 + $0xc4] sm:$0xf]
      %v225 = vld [vmem:[%s166 + $0xc8] sm:$0xf]
      %v226 = vld [vmem:[%s166 + $0xcc] sm:$0xf]
      %v227 = vld [vmem:[%s166 + $0xd0] sm:$0xf]
      %v228 = vld [vmem:[%s166 + $0xd4] sm:$0xf]
      %v229 = vld [vmem:[%s166 + $0xd8] sm:$0xf]
      %v230 = vld [vmem:[%s166 + $0xdc] sm:$0xf]
      %v231 = vld [vmem:[%s166 + $0xe0] sm:$0xf]
      %v232 = vld [vmem:[%s166 + $0xe4] sm:$0xf]
      %v233 = vld [vmem:[%s166 + $0xe8] sm:$0xf]
      %v234 = vld [vmem:[%s166 + $0xec] sm:$0xf]
      %v235 = vld [vmem:[%s166 + $0xf0] sm:$0xf]
      %v236 = vld [vmem:[%s166 + $0xf4] sm:$0xf]
      %v237 = vld [vmem:[%s166 + $0xf8] sm:$0xf]
      %v238 = vld [vmem:[%s166 + $0xfc] sm:$0xf]
      %v239 = vld [vmem:[%s166 + $0x100] sm:$0xf]
      %v240 = vld [vmem:[%s166 + $0x104] sm:$0xf]
      %v241 = vld [vmem:[%s166 + $0x108] sm:$0xf]
      %v242 = vld [vmem:[%s166 + $0x10c] sm:$0xf]
      %v243 = vld [vmem:[%s166 + $0x110] sm:$0xf]
      %v244 = vld [vmem:[%s166 + $0x114] sm:$0xf]
      %v245 = vld [vmem:[%s166 + $0x118] sm:$0xf]
      %v246 = vld [vmem:[%s166 + $0x11c] sm:$0xf]
      %v247 = vld [vmem:[%s166 + $0x120] sm:$0xf]
      %v248 = vld [vmem:[%s166 + $0x124] sm:$0xf]
      %v249 = vld [vmem:[%s166 + $0x128] sm:$0xf]
      %v250 = vld [vmem:[%s166 + $0x12c] sm:$0xf]
      %v251 = vld [vmem:[%s166 + $0x130] sm:$0xf]
      %v252 = vld [vmem:[%s166 + $0x134] sm:$0xf]
      %v253 = vld [vmem:[%s166 + $0x138] sm:$0xf]
      %v254 = vld [vmem:[%s166 + $0x13c] sm:$0xf]
      %v255 = vld [vmem:[%s166 + $0x140] sm:$0xf]
      %v256 = vld [vmem:[%s166 + $0x144] sm:$0xf]
      %v257 = vld [vmem:[%s166 + $0x148] sm:$0xf]
      %v258 = vld [vmem:[%s166 + $0x14c] sm:$0xf]
      %v259 = vld [vmem:[%s166 + $0x150] sm:$0xf]
      %v260 = vld [vmem:[%s166 + $0x154] sm:$0xf]
      %v261 = vld [vmem:[%s166 + $0x158] sm:$0xf]
      %v262 = vld [vmem:[%s166 + $0x15c] sm:$0xf]
      %v263 = vld [vmem:[%s166 + $0x160] sm:$0xf]
      %v264 = vld [vmem:[%s166 + $0x164] sm:$0xf]
      %v265 = vld [vmem:[%s166 + $0x168] sm:$0xf]
      %v266 = vld [vmem:[%s166 + $0x16c] sm:$0xf]
      %v267 = vld [vmem:[%s166 + $0x170] sm:$0xf]
      %v268 = vld [vmem:[%s166 + $0x174] sm:$0xf]
      %v269 = vld [vmem:[%s166 + $0x178] sm:$0xf]
      %v270 = vld [vmem:[%s166 + $0x17c] sm:$0xf]
      %v271 = vld [vmem:[%s166 + $0x180] sm:$0xf]
      %v272 = vld [vmem:[%s166 + $0x184] sm:$0xf]
      %v273 = vld [vmem:[%s166 + $0x188] sm:$0xf]
      %v274 = vld [vmem:[%s166 + $0x18c] sm:$0xf]
      %v275 = vld [vmem:[%s166 + $0x190] sm:$0xf]
      %v276 = vld [vmem:[%s166 + $0x194] sm:$0xf]
      %v277 = vld [vmem:[%s166 + $0x198] sm:$0xf]
      %v278 = vld [vmem:[%s166 + $0x19c] sm:$0xf]
      %v279 = vld [vmem:[%s166 + $0x1a0] sm:$0xf]
      %v280 = vld [vmem:[%s166 + $0x1a4] sm:$0xf]
      %v281 = vld [vmem:[%s166 + $0x1a8] sm:$0xf]
      %v282 = vld [vmem:[%s166 + $0x1ac] sm:$0xf]
      %v283 = vld [vmem:[%s166 + $0x1b0] sm:$0xf]
      %v284 = vld [vmem:[%s166 + $0x1b4] sm:$0xf]
      %v285 = vld [vmem:[%s166 + $0x1b8] sm:$0xf]
      %v286 = vld [vmem:[%s166 + $0x1bc] sm:$0xf]
      %v287 = vld [vmem:[%s166 + $0x1c0] sm:$0xf]
      %v288 = vld [vmem:[%s166 + $0x1c4] sm:$0xf]
      %v289 = vld [vmem:[%s166 + $0x1c8] sm:$0xf]
      %v290 = vld [vmem:[%s166 + $0x1cc] sm:$0xf]
      %v291 = vld [vmem:[%s166 + $0x1d0] sm:$0xf]
      %v292 = vld [vmem:[%s166 + $0x1d4] sm:$0xf]
      %v293 = vld [vmem:[%s166 + $0x1d8] sm:$0xf]
      %v294 = vld [vmem:[%s166 + $0x1dc] sm:$0xf]
      %v295 = vld [vmem:[%s166 + $0x1e0] sm:$0xf]
      %v296 = vld [vmem:[%s166 + $0x1e4] sm:$0xf]
      %v297 = vld [vmem:[%s166 + $0x1e8] sm:$0xf]
      %v298 = vld [vmem:[%s166 + $0x1ec] sm:$0xf]
      %v299 = vld [vmem:[%s166 + $0x1f0] sm:$0xf]
      %v300 = vld [vmem:[%s166 + $0x1f4] sm:$0xf]
      %v301 = vld [vmem:[%s166 + $0x1f8] sm:$0xf]
      %v302 = vld [vmem:[%s166 + $0x1fc] sm:$0xf]
      %v303 = vld [vmem:[%s1] sm:$0xf]
      %v304 = vld [vmem:[%s1 + $0x4] sm:$0xf]
      %v305 = vld [vmem:[%s1 + $0x8] sm:$0xf]
      %v306 = vld [vmem:[%s1 + $0xc] sm:$0xf]
      %v307 = vld [vmem:[%s1 + $0x10] sm:$0xf]
      %v308 = vld [vmem:[%s1 + $0x14] sm:$0xf]
      %v309 = vld [vmem:[%s1 + $0x18] sm:$0xf]
      %v310 = vld [vmem:[%s1 + $0x1c] sm:$0xf]
      %v311 = vld [vmem:[%s1 + $0x20] sm:$0xf]
      %v312 = vld [vmem:[%s1 + $0x24] sm:$0xf]
      %v313 = vld [vmem:[%s1 + $0x28] sm:$0xf]
      %v314 = vld [vmem:[%s1 + $0x2c] sm:$0xf]
      %v315 = vld [vmem:[%s1 + $0x30] sm:$0xf]
      %v316 = vld [vmem:[%s1 + $0x34] sm:$0xf]
      %v317 = vld [vmem:[%s1 + $0x38] sm:$0xf]
      %v318 = vld [vmem:[%s1 + $0x3c] sm:$0xf]
      %v319 = vld [vmem:[%s2] sm:$0x1]
      %v321 = vlaneseq
      %v322 = vshrl.u32 %v321, 7
      %v323 = vsub.s32 0, %v322
      %v324 = vrot.slane %v319, %v323
      %v454 = vunpack.c.l.b16 %v175
      %v455 = vunpack.c.l.b16 %v176
      %v456 = vunpack.c.l.b16 %v177
      %v457 = vunpack.c.l.b16 %v178
      %v458 = vunpack.c.l.b16 %v179
      %v459 = vunpack.c.l.b16 %v180
      %v460 = vunpack.c.l.b16 %v181
      %v461 = vunpack.c.l.b16 %v182
      %v462 = vunpack.c.l.b16 %v183
      %v463 = vunpack.c.l.b16 %v184
      %v464 = vunpack.c.l.b16 %v185
      %v465 = vunpack.c.l.b16 %v186
      %v466 = vunpack.c.l.b16 %v187
      %v467 = vunpack.c.l.b16 %v188
      %v468 = vunpack.c.l.b16 %v189
      %v469 = vunpack.c.l.b16 %v190
      %v470 = vunpack.c.l.b16 %v191
      %v471 = vunpack.c.l.b16 %v192
      %v472 = vunpack.c.l.b16 %v193
      %v473 = vunpack.c.l.b16 %v194
      %v474 = vunpack.c.l.b16 %v195
      %v475 = vunpack.c.l.b16 %v196
      %v476 = vunpack.c.l.b16 %v197
      %v477 = vunpack.c.l.b16 %v198
      %v478 = vunpack.c.l.b16 %v199
      %v479 = vunpack.c.l.b16 %v200
      %v480 = vunpack.c.l.b16 %v201
      %v481 = vunpack.c.l.b16 %v202
      %v482 = vunpack.c.l.b16 %v203
      %v483 = vunpack.c.l.b16 %v204
      %v484 = vunpack.c.l.b16 %v205
      %v485 = vunpack.c.l.b16 %v206
      %v486 = vunpack.c.l.b16 %v207
      %v487 = vunpack.c.l.b16 %v208
      %v488 = vunpack.c.l.b16 %v209
      %v489 = vunpack.c.l.b16 %v210
      %v490 = vunpack.c.l.b16 %v211
      %v491 = vunpack.c.l.b16 %v212
      %v492 = vunpack.c.l.b16 %v213
      %v493 = vunpack.c.l.b16 %v214
      %v494 = vunpack.c.l.b16 %v215
      %v495 = vunpack.c.l.b16 %v216
      %v496 = vunpack.c.l.b16 %v217
      %v497 = vunpack.c.l.b16 %v218
      %v498 = vunpack.c.l.b16 %v219
      %v499 = vunpack.c.l.b16 %v220
      %v500 = vunpack.c.l.b16 %v221
      %v501 = vunpack.c.l.b16 %v222
      %v502 = vunpack.c.l.b16 %v223
      %v503 = vunpack.c.l.b16 %v224
      %v504 = vunpack.c.l.b16 %v225
      %v505 = vunpack.c.l.b16 %v226
      %v506 = vunpack.c.l.b16 %v227
      %v507 = vunpack.c.l.b16 %v228
      %v508 = vunpack.c.l.b16 %v229
      %v509 = vunpack.c.l.b16 %v230
      %v510 = vunpack.c.l.b16 %v231
      %v511 = vunpack.c.l.b16 %v232
      %v512 = vunpack.c.l.b16 %v233
      %v513 = vunpack.c.l.b16 %v234
      %v514 = vunpack.c.l.b16 %v235
      %v515 = vunpack.c.l.b16 %v236
      %v516 = vunpack.c.l.b16 %v237
      %v517 = vunpack.c.l.b16 %v238
      %v518 = vunpack.c.l.b16 %v239
      %v519 = vunpack.c.l.b16 %v240
      %v520 = vunpack.c.l.b16 %v241
      %v521 = vunpack.c.l.b16 %v242
      %v522 = vunpack.c.l.b16 %v243
      %v523 = vunpack.c.l.b16 %v244
      %v524 = vunpack.c.l.b16 %v245
      %v525 = vunpack.c.l.b16 %v246
      %v526 = vunpack.c.l.b16 %v247
      %v527 = vunpack.c.l.b16 %v248
      %v528 = vunpack.c.l.b16 %v249
      %v529 = vunpack.c.l.b16 %v250
      %v530 = vunpack.c.l.b16 %v251
      %v531 = vunpack.c.l.b16 %v252
      %v532 = vunpack.c.l.b16 %v253
      %v533 = vunpack.c.l.b16 %v254
      %v534 = vunpack.c.l.b16 %v255
      %v535 = vunpack.c.l.b16 %v256
      %v536 = vunpack.c.l.b16 %v257
      %v537 = vunpack.c.l.b16 %v258
      %v538 = vunpack.c.l.b16 %v259
      %v539 = vunpack.c.l.b16 %v260
      %v540 = vunpack.c.l.b16 %v261
      %v541 = vunpack.c.l.b16 %v262
      %v542 = vunpack.c.l.b16 %v263
      %v543 = vunpack.c.l.b16 %v264
      %v544 = vunpack.c.l.b16 %v265
      %v545 = vunpack.c.l.b16 %v266
      %v546 = vunpack.c.l.b16 %v267
      %v547 = vunpack.c.l.b16 %v268
      %v548 = vunpack.c.l.b16 %v269
      %v549 = vunpack.c.l.b16 %v270
      %v550 = vunpack.c.l.b16 %v271
      %v551 = vunpack.c.l.b16 %v272
      %v552 = vunpack.c.l.b16 %v273
      %v553 = vunpack.c.l.b16 %v274
      %v554 = vunpack.c.l.b16 %v275
      %v555 = vunpack.c.l.b16 %v276
      %v556 = vunpack.c.l.b16 %v277
      %v557 = vunpack.c.l.b16 %v278
      %v558 = vunpack.c.l.b16 %v279
      %v559 = vunpack.c.l.b16 %v280
      %v560 = vunpack.c.l.b16 %v281
      %v561 = vunpack.c.l.b16 %v282
      %v562 = vunpack.c.l.b16 %v283
      %v563 = vunpack.c.l.b16 %v284
      %v564 = vunpack.c.l.b16 %v285
      %v565 = vunpack.c.l.b16 %v286
      %v566 = vunpack.c.l.b16 %v287
      %v567 = vunpack.c.l.b16 %v288
      %v568 = vunpack.c.l.b16 %v289
      %v569 = vunpack.c.l.b16 %v290
      %v570 = vunpack.c.l.b16 %v291
      %v571 = vunpack.c.l.b16 %v292
      %v572 = vunpack.c.l.b16 %v293
      %v573 = vunpack.c.l.b16 %v294
      %v574 = vunpack.c.l.b16 %v295
      %v575 = vunpack.c.l.b16 %v296
      %v576 = vunpack.c.l.b16 %v297
      %v577 = vunpack.c.l.b16 %v298
      %v578 = vunpack.c.l.b16 %v299
      %v579 = vunpack.c.l.b16 %v300
      %v580 = vunpack.c.l.b16 %v301
      %v581 = vunpack.c.l.b16 %v302
      %v582 = vpack.c.b16 %v455, %v454
      %v583 = vpack.c.b16 %v457, %v456
      %v584 = vpack.c.b16 %v459, %v458
      %v585 = vpack.c.b16 %v461, %v460
      %v586 = vpack.c.b16 %v463, %v462
      %v587 = vpack.c.b16 %v465, %v464
      %v588 = vpack.c.b16 %v467, %v466
      %v589 = vpack.c.b16 %v469, %v468
      %v590 = vpack.c.b16 %v471, %v470
      %v591 = vpack.c.b16 %v473, %v472
      %v592 = vpack.c.b16 %v475, %v474
      %v593 = vpack.c.b16 %v477, %v476
      %v594 = vpack.c.b16 %v479, %v478
      %v595 = vpack.c.b16 %v481, %v480
      %v596 = vpack.c.b16 %v483, %v482
      %v597 = vpack.c.b16 %v485, %v484
      %v598 = vpack.c.b16 %v487, %v486
      %v599 = vpack.c.b16 %v489, %v488
      %v600 = vpack.c.b16 %v491, %v490
      %v601 = vpack.c.b16 %v493, %v492
      %v602 = vpack.c.b16 %v495, %v494
      %v603 = vpack.c.b16 %v497, %v496
      %v604 = vpack.c.b16 %v499, %v498
      %v605 = vpack.c.b16 %v501, %v500
      %v606 = vpack.c.b16 %v503, %v502
      %v607 = vpack.c.b16 %v505, %v504
      %v608 = vpack.c.b16 %v507, %v506
      %v609 = vpack.c.b16 %v509, %v508
      %v610 = vpack.c.b16 %v511, %v510
      %v611 = vpack.c.b16 %v513, %v512
      %v612 = vpack.c.b16 %v515, %v514
      %v613 = vpack.c.b16 %v517, %v516
      %v614 = vpack.c.b16 %v519, %v518
      %v615 = vpack.c.b16 %v521, %v520
      %v616 = vpack.c.b16 %v523, %v522
      %v617 = vpack.c.b16 %v525, %v524
      %v618 = vpack.c.b16 %v527, %v526
      %v619 = vpack.c.b16 %v529, %v528
      %v620 = vpack.c.b16 %v531, %v530
      %v621 = vpack.c.b16 %v533, %v532
      %v622 = vpack.c.b16 %v535, %v534
      %v623 = vpack.c.b16 %v537, %v536
      %v624 = vpack.c.b16 %v539, %v538
      %v625 = vpack.c.b16 %v541, %v540
      %v626 = vpack.c.b16 %v543, %v542
      %v627 = vpack.c.b16 %v545, %v544
      %v628 = vpack.c.b16 %v547, %v546
      %v629 = vpack.c.b16 %v549, %v548
      %v630 = vpack.c.b16 %v551, %v550
      %v631 = vpack.c.b16 %v553, %v552
      %v632 = vpack.c.b16 %v555, %v554
      %v633 = vpack.c.b16 %v557, %v556
      %v634 = vpack.c.b16 %v559, %v558
      %v635 = vpack.c.b16 %v561, %v560
      %v636 = vpack.c.b16 %v563, %v562
      %v637 = vpack.c.b16 %v565, %v564
      %v638 = vpack.c.b16 %v567, %v566
      %v639 = vpack.c.b16 %v569, %v568
      %v640 = vpack.c.b16 %v571, %v570
      %v641 = vpack.c.b16 %v573, %v572
      %v642 = vpack.c.b16 %v575, %v574
      %v643 = vpack.c.b16 %v577, %v576
      %v644 = vpack.c.b16 %v579, %v578
      %v645 = vpack.c.b16 %v581, %v580
      %v726 = vunpack.c.l.b16 %v303
      %v727 = vunpack.c.l.b16 %v304
      %v728 = vunpack.c.l.b16 %v305
      %v729 = vunpack.c.l.b16 %v306
      %v730 = vunpack.c.l.b16 %v307
      %v731 = vunpack.c.l.b16 %v308
      %v732 = vunpack.c.l.b16 %v309
      %v733 = vunpack.c.l.b16 %v310
      %v734 = vunpack.c.l.b16 %v311
      %v735 = vunpack.c.l.b16 %v312
      %v736 = vunpack.c.l.b16 %v313
      %v737 = vunpack.c.l.b16 %v314
      %v738 = vunpack.c.l.b16 %v315
      %v739 = vunpack.c.l.b16 %v316
      %v740 = vunpack.c.l.b16 %v317
      %v741 = vunpack.c.l.b16 %v318
      %v742 = vpack.c.b16 %v727, %v726
      %v743 = vpack.c.b16 %v729, %v728
      %v744 = vpack.c.b16 %v731, %v730
      %v745 = vpack.c.b16 %v733, %v732
      %v746 = vpack.c.b16 %v735, %v734
      %v747 = vpack.c.b16 %v737, %v736
      %v748 = vpack.c.b16 %v739, %v738
      %v749 = vpack.c.b16 %v741, %v740
      %758 = vmatprep.subr.bf16.mxu0 0
      %759 = vmatpush1.bf16.msra.mxu0 %v742
      %760 = vmatprep.subr.bf16.mxu0 0
      %761 = vmatpush1.bf16.msra.mxu0 %v743
      %762 = vmatprep.subr.bf16.mxu0 0
      %763 = vmatpush1.bf16.msra.mxu0 %v744
      %764 = vmatprep.subr.bf16.mxu0 0
      %765 = vmatpush1.bf16.msra.mxu0 %v745
      %766 = vmatprep.subr.bf16.mxu0 0
      %767 = vmatpush1.bf16.msra.mxu0 %v746
      %768 = vmatprep.subr.bf16.mxu0 0
      %769 = vmatpush1.bf16.msra.mxu0 %v747
      %770 = vmatprep.subr.bf16.mxu0 0
      %771 = vmatpush1.bf16.msra.mxu0 %v748
      %772 = vmatprep.subr.bf16.mxu0 0
      %773 = vmatpush1.bf16.msra.mxu0 %v749
      %774 = vmatprep.subr.bf16.mxu0 0
      %775 = vmatpush1.bf16.msra.mxu0 0
      %776 = vmatprep.subr.bf16.mxu0 0
      %777 = vmatpush1.bf16.msra.mxu0 0
      %778 = vmatprep.subr.bf16.mxu0 0
      %779 = vmatpush1.bf16.msra.mxu0 0
      %780 = vmatprep.subr.bf16.mxu0 0
      %781 = vmatpush1.bf16.msra.mxu0 0
      %782 = vmatprep.subr.bf16.mxu0 0
      %783 = vmatpush1.bf16.msra.mxu0 0
      %784 = vmatprep.subr.bf16.mxu0 0
      %785 = vmatpush1.bf16.msra.mxu0 0
      %786 = vmatprep.subr.bf16.mxu0 0
      %787 = vmatpush1.bf16.msra.mxu0 0
      %788 = vmatprep.subr.bf16.mxu0 0
      %789 = vmatpush1.bf16.msra.mxu0 0
      %790 = vmatprep.mubr.bf16.mxu0 0
      %791 = vmatmul.mubr.bf16.gmra.mrb[0].mxu0 %v582
      %v792 = vpop.f32.mrb[0].mxu0
      %v793 = vadd.f32 %v324, %v792
      %v794 = vpop.f32.mrb[0].mxu0
      %v795 = vpop.f32.mrb[0].mxu0
      %v796 = vadd.f32 %v324, %v795
      %v797 = vpop.f32.mrb[0].mxu0
      %798 = vmatprep.mubr.bf16.mxu0 0
      %799 = vmatmul.mubr.bf16.gmra.mrb[0].mxu0 %v583
      %v800 = vpop.f32.mrb[0].mxu0
      %v801 = vadd.f32 %v324, %v800
      %v802 = vpop.f32.mrb[0].mxu0
      %v803 = vpop.f32.mrb[0].mxu0
      %v804 = vadd.f32 %v324, %v803
      %v805 = vpop.f32.mrb[0].mxu0
      %806 = vmatprep.mubr.bf16.mxu0 0
      %807 = vmatmul.mubr.bf16.gmra.mrb[0].mxu0 %v584
      %v808 = vpop.f32.mrb[0].mxu0
      %v809 = vadd.f32 %v324, %v808
      %v810 = vpop.f32.mrb[0].mxu0
      %v811 = vpop.f32.mrb[0].mxu0
      %v812 = vadd.f32 %v324, %v811
      %v813 = vpop.f32.mrb[0].mxu0
      %814 = vmatprep.mubr.bf16.mxu0 0
      %815 = vmatmul.mubr.bf16.gmra.mrb[0].mxu0 %v585
      %v816 = vpop.f32.mrb[0].mxu0
      %v817 = vadd.f32 %v324, %v816
      %v818 = vpop.f32.mrb[0].mxu0
      %v819 = vpop.f32.mrb[0].mxu0
      %v820 = vadd.f32 %v324, %v819
      %v821 = vpop.f32.mrb[0].mxu0
      %822 = vmatprep.mubr.bf16.mxu0 0
      %823 = vmatmul.mubr.bf16.gmra.mrb[0].mxu0 %v586
      %v824 = vpop.f32.mrb[0].mxu0
      %v825 = vadd.f32 %v324, %v824
      %v826 = vpop.f32.mrb[0].mxu0
      %v827 = vpop.f32.mrb[0].mxu0
      %v828 = vadd.f32 %v324, %v827
      %v829 = vpop.f32.mrb[0].mxu0
      %830 = vmatprep.mubr.bf16.mxu0 0
      %831 = vmatmul.mubr.bf16.gmra.mrb[0].mxu0 %v587
      %v832 = vpop.f32.mrb[0].mxu0
      %v833 = vadd.f32 %v324, %v832
      %v834 = vpop.f32.mrb[0].mxu0
      %v835 = vpop.f32.mrb[0].mxu0
      %v836 = vadd.f32 %v324, %v835
      %v837 = vpop.f32.mrb[0].mxu0
      %838 = vmatprep.mubr.bf16.mxu0 0
      %839 = vmatmul.mubr.bf16.gmra.mrb[0].mxu0 %v588
      %v840 = vpop.f32.mrb[0].mxu0
      %v841 = vadd.f32 %v324, %v840
      %v842 = vpop.f32.mrb[0].mxu0
      %v843 = vpop.f32.mrb[0].mxu0
      %v844 = vadd.f32 %v324, %v843
      %v845 = vpop.f32.mrb[0].mxu0
      %846 = vmatprep.mubr.bf16.mxu0 0
      %847 = vmatmul.mubr.bf16.gmra.mrb[0].mxu0 %v589
      %v848 = vpop.f32.mrb[0].mxu0
      %v849 = vadd.f32 %v324, %v848
      %v850 = vpop.f32.mrb[0].mxu0
      %v851 = vpop.f32.mrb[0].mxu0
      %v852 = vadd.f32 %v324, %v851
      %v853 = vpop.f32.mrb[0].mxu0
      %854 = vmatprep.mubr.bf16.mxu0 0
      %855 = vmatmul.mubr.bf16.gmra.mrb[0].mxu0 %v590
      %v856 = vpop.f32.mrb[0].mxu0
      %v857 = vadd.f32 %v324, %v856
      %v858 = vpop.f32.mrb[0].mxu0
      %v859 = vpop.f32.mrb[0].mxu0
      %v860 = vadd.f32 %v324, %v859
      %v861 = vpop.f32.mrb[0].mxu0
      %862 = vmatprep.mubr.bf16.mxu0 0
      %863 = vmatmul.mubr.bf16.gmra.mrb[0].mxu0 %v591
      %v864 = vpop.f32.mrb[0].mxu0
      %v865 = vadd.f32 %v324, %v864
      %v866 = vpop.f32.mrb[0].mxu0
      %v867 = vpop.f32.mrb[0].mxu0
      %v868 = vadd.f32 %v324, %v867
      %v869 = vpop.f32.mrb[0].mxu0
      %870 = vmatprep.mubr.bf16.mxu0 0
      %871 = vmatmul.mubr.bf16.gmra.mrb[0].mxu0 %v592
      %v872 = vpop.f32.mrb[0].mxu0
      %v873 = vadd.f32 %v324, %v872
      %v874 = vpop.f32.mrb[0].mxu0
      %v875 = vpop.f32.mrb[0].mxu0
      %v876 = vadd.f32 %v324, %v875
      %v877 = vpop.f32.mrb[0].mxu0
      %878 = vmatprep.mubr.bf16.mxu0 0
      %879 = vmatmul.mubr.bf16.gmra.mrb[0].mxu0 %v593
      %v880 = vpop.f32.mrb[0].mxu0
      %v881 = vadd.f32 %v324, %v880
      %v882 = vpop.f32.mrb[0].mxu0
      %v883 = vpop.f32.mrb[0].mxu0
      %v884 = vadd.f32 %v324, %v883
      %v885 = vpop.f32.mrb[0].mxu0
      %886 = vmatprep.mubr.bf16.mxu0 0
      %887 = vmatmul.mubr.bf16.gmra.mrb[0].mxu0 %v594
      %v888 = vpop.f32.mrb[0].mxu0
      %v889 = vadd.f32 %v324, %v888
      %v890 = vpop.f32.mrb[0].mxu0
      %v891 = vpop.f32.mrb[0].mxu0
      %v892 = vadd.f32 %v324, %v891
      %v893 = vpop.f32.mrb[0].mxu0
      %894 = vmatprep.mubr.bf16.mxu0 0
      %895 = vmatmul.mubr.bf16.gmra.mrb[0].mxu0 %v595
      %v896 = vpop.f32.mrb[0].mxu0
      %v897 = vadd.f32 %v324, %v896
      %v898 = vpop.f32.mrb[0].mxu0
      %v899 = vpop.f32.mrb[0].mxu0
      %v900 = vadd.f32 %v324, %v899
      %v901 = vpop.f32.mrb[0].mxu0
      %902 = vmatprep.mubr.bf16.mxu0 0
      %903 = vmatmul.mubr.bf16.gmra.mrb[0].mxu0 %v596
      %v904 = vpop.f32.mrb[0].mxu0
      %v905 = vadd.f32 %v324, %v904
      %v906 = vpop.f32.mrb[0].mxu0
      %v907 = vpop.f32.mrb[0].mxu0
      %v908 = vadd.f32 %v324, %v907
      %v909 = vpop.f32.mrb[0].mxu0
      %910 = vmatprep.mubr.bf16.mxu0 0
      %911 = vmatmul.mubr.bf16.gmra.mrb[0].mxu0 %v597
      %v912 = vpop.f32.mrb[0].mxu0
      %v913 = vadd.f32 %v324, %v912
      %v914 = vpop.f32.mrb[0].mxu0
      %v915 = vpop.f32.mrb[0].mxu0
      %v916 = vadd.f32 %v324, %v915
      %v917 = vpop.f32.mrb[0].mxu0
      %918 = vmatprep.mubr.bf16.mxu0 0
      %919 = vmatmul.mubr.bf16.gmra.mrb[0].mxu0 %v598
      %v920 = vpop.f32.mrb[0].mxu0
      %v921 = vadd.f32 %v324, %v920
      %v922 = vpop.f32.mrb[0].mxu0
      %v923 = vpop.f32.mrb[0].mxu0
      %v924 = vadd.f32 %v324, %v923
      %v925 = vpop.f32.mrb[0].mxu0
      %926 = vmatprep.mubr.bf16.mxu0 0
      %927 = vmatmul.mubr.bf16.gmra.mrb[0].mxu0 %v599
      %v928 = vpop.f32.mrb[0].mxu0
      %v929 = vadd.f32 %v324, %v928
      %v930 = vpop.f32.mrb[0].mxu0
      %v931 = vpop.f32.mrb[0].mxu0
      %v932 = vadd.f32 %v324, %v931
      %v933 = vpop.f32.mrb[0].mxu0
      %934 = vmatprep.mubr.bf16.mxu0 0
      %935 = vmatmul.mubr.bf16.gmra.mrb[0].mxu0 %v600
      %v936 = vpop.f32.mrb[0].mxu0
      %v937 = vadd.f32 %v324, %v936
      %v938 = vpop.f32.mrb[0].mxu0
      %v939 = vpop.f32.mrb[0].mxu0
      %v940 = vadd.f32 %v324, %v939
      %v941 = vpop.f32.mrb[0].mxu0
      %942 = vmatprep.mubr.bf16.mxu0 0
      %943 = vmatmul.mubr.bf16.gmra.mrb[0].mxu0 %v601
      %v944 = vpop.f32.mrb[0].mxu0
      %v945 = vadd.f32 %v324, %v944
      %v946 = vpop.f32.mrb[0].mxu0
      %v947 = vpop.f32.mrb[0].mxu0
      %v948 = vadd.f32 %v324, %v947
      %v949 = vpop.f32.mrb[0].mxu0
      %950 = vmatprep.mubr.bf16.mxu0 0
      %951 = vmatmul.mubr.bf16.gmra.mrb[0].mxu0 %v602
      %v952 = vpop.f32.mrb[0].mxu0
      %v953 = vadd.f32 %v324, %v952
      %v954 = vpop.f32.mrb[0].mxu0
      %v955 = vpop.f32.mrb[0].mxu0
      %v956 = vadd.f32 %v324, %v955
      %v957 = vpop.f32.mrb[0].mxu0
      %958 = vmatprep.mubr.bf16.mxu0 0
      %959 = vmatmul.mubr.bf16.gmra.mrb[0].mxu0 %v603
      %v960 = vpop.f32.mrb[0].mxu0
      %v961 = vadd.f32 %v324, %v960
      %v962 = vpop.f32.mrb[0].mxu0
      %v963 = vpop.f32.mrb[0].mxu0
      %v964 = vadd.f32 %v324, %v963
      %v965 = vpop.f32.mrb[0].mxu0
      %966 = vmatprep.mubr.bf16.mxu0 0
      %967 = vmatmul.mubr.bf16.gmra.mrb[0].mxu0 %v604
      %v968 = vpop.f32.mrb[0].mxu0
      %v969 = vadd.f32 %v324, %v968
      %v970 = vpop.f32.mrb[0].mxu0
      %v971 = vpop.f32.mrb[0].mxu0
      %v972 = vadd.f32 %v324, %v971
      %v973 = vpop.f32.mrb[0].mxu0
      %974 = vmatprep.mubr.bf16.mxu0 0
      %975 = vmatmul.mubr.bf16.gmra.mrb[0].mxu0 %v605
      %v976 = vpop.f32.mrb[0].mxu0
      %v977 = vadd.f32 %v324, %v976
      %v978 = vpop.f32.mrb[0].mxu0
      %v979 = vpop.f32.mrb[0].mxu0
      %v980 = vadd.f32 %v324, %v979
      %v981 = vpop.f32.mrb[0].mxu0
      %982 = vmatprep.mubr.bf16.mxu0 0
      %983 = vmatmul.mubr.bf16.gmra.mrb[0].mxu0 %v606
      %v984 = vpop.f32.mrb[0].mxu0
      %v985 = vadd.f32 %v324, %v984
      %v986 = vpop.f32.mrb[0].mxu0
      %v987 = vpop.f32.mrb[0].mxu0
      %v988 = vadd.f32 %v324, %v987
      %v989 = vpop.f32.mrb[0].mxu0
      %990 = vmatprep.mubr.bf16.mxu0 0
      %991 = vmatmul.mubr.bf16.gmra.mrb[0].mxu0 %v607
      %v992 = vpop.f32.mrb[0].mxu0
      %v993 = vadd.f32 %v324, %v992
      %v994 = vpop.f32.mrb[0].mxu0
      %v995 = vpop.f32.mrb[0].mxu0
      %v996 = vadd.f32 %v324, %v995
      %v997 = vpop.f32.mrb[0].mxu0
      %998 = vmatprep.mubr.bf16.mxu0 0
      %999 = vmatmul.mubr.bf16.gmra.mrb[0].mxu0 %v608
      %v1000 = vpop.f32.mrb[0].mxu0
      %v1001 = vadd.f32 %v324, %v1000
      %v1002 = vpop.f32.mrb[0].mxu0
      %v1003 = vpop.f32.mrb[0].mxu0
      %v1004 = vadd.f32 %v324, %v1003
      %v1005 = vpop.f32.mrb[0].mxu0
      %1006 = vmatprep.mubr.bf16.mxu0 0
      %1007 = vmatmul.mubr.bf16.gmra.mrb[0].mxu0 %v609
      %v1008 = vpop.f32.mrb[0].mxu0
      %v1009 = vadd.f32 %v324, %v1008
      %v1010 = vpop.f32.mrb[0].mxu0
      %v1011 = vpop.f32.mrb[0].mxu0
      %v1012 = vadd.f32 %v324, %v1011
      %v1013 = vpop.f32.mrb[0].mxu0
      %1014 = vmatprep.mubr.bf16.mxu0 0
      %1015 = vmatmul.mubr.bf16.gmra.mrb[0].mxu0 %v610
      %v1016 = vpop.f32.mrb[0].mxu0
      %v1017 = vadd.f32 %v324, %v1016
      %v1018 = vpop.f32.mrb[0].mxu0
      %v1019 = vpop.f32.mrb[0].mxu0
      %v1020 = vadd.f32 %v324, %v1019
      %v1021 = vpop.f32.mrb[0].mxu0
      %1022 = vmatprep.mubr.bf16.mxu0 0
      %1023 = vmatmul.mubr.bf16.gmra.mrb[0].mxu0 %v611
      %v1024 = vpop.f32.mrb[0].mxu0
      %v1025 = vadd.f32 %v324, %v1024
      %v1026 = vpop.f32.mrb[0].mxu0
      %v1027 = vpop.f32.mrb[0].mxu0
      %v1028 = vadd.f32 %v324, %v1027
      %v1029 = vpop.f32.mrb[0].mxu0
      %1030 = vmatprep.mubr.bf16.mxu0 0
      %1031 = vmatmul.mubr.bf16.gmra.mrb[0].mxu0 %v612
      %v1032 = vpop.f32.mrb[0].mxu0
      %v1033 = vadd.f32 %v324, %v1032
      %v1034 = vpop.f32.mrb[0].mxu0
      %v1035 = vpop.f32.mrb[0].mxu0
      %v1036 = vadd.f32 %v324, %v1035
      %v1037 = vpop.f32.mrb[0].mxu0
      %1038 = vmatprep.mubr.bf16.mxu0 0
      %1039 = vmatmul.mubr.bf16.gmra.mrb[0].mxu0 %v613
      %v1040 = vpop.f32.mrb[0].mxu0
      %v1041 = vadd.f32 %v324, %v1040
      %v1042 = vpop.f32.mrb[0].mxu0
      %v1043 = vpop.f32.mrb[0].mxu0
      %v1044 = vadd.f32 %v324, %v1043
      %v1045 = vpop.f32.mrb[0].mxu0
      %1046 = vmatprep.mubr.bf16.mxu0 0
      %1047 = vmatmul.mubr.bf16.gmra.mrb[0].mxu0 %v614
      %v1048 = vpop.f32.mrb[0].mxu0
      %v1049 = vadd.f32 %v324, %v1048
      %v1050 = vpop.f32.mrb[0].mxu0
      %v1051 = vpop.f32.mrb[0].mxu0
      %v1052 = vadd.f32 %v324, %v1051
      %v1053 = vpop.f32.mrb[0].mxu0
      %1054 = vmatprep.mubr.bf16.mxu0 0
      %1055 = vmatmul.mubr.bf16.gmra.mrb[0].mxu0 %v615
      %v1056 = vpop.f32.mrb[0].mxu0
      %v1057 = vadd.f32 %v324, %v1056
      %v1058 = vpop.f32.mrb[0].mxu0
      %v1059 = vpop.f32.mrb[0].mxu0
      %v1060 = vadd.f32 %v324, %v1059
      %v1061 = vpop.f32.mrb[0].mxu0
      %1062 = vmatprep.mubr.bf16.mxu0 0
      %1063 = vmatmul.mubr.bf16.gmra.mrb[0].mxu0 %v616
      %v1064 = vpop.f32.mrb[0].mxu0
      %v1065 = vadd.f32 %v324, %v1064
      %v1066 = vpop.f32.mrb[0].mxu0
      %v1067 = vpop.f32.mrb[0].mxu0
      %v1068 = vadd.f32 %v324, %v1067
      %v1069 = vpop.f32.mrb[0].mxu0
      %1070 = vmatprep.mubr.bf16.mxu0 0
      %1071 = vmatmul.mubr.bf16.gmra.mrb[0].mxu0 %v617
      %v1072 = vpop.f32.mrb[0].mxu0
      %v1073 = vadd.f32 %v324, %v1072
      %v1074 = vpop.f32.mrb[0].mxu0
      %v1075 = vpop.f32.mrb[0].mxu0
      %v1076 = vadd.f32 %v324, %v1075
      %v1077 = vpop.f32.mrb[0].mxu0
      %1078 = vmatprep.mubr.bf16.mxu0 0
      %1079 = vmatmul.mubr.bf16.gmra.mrb[0].mxu0 %v618
      %v1080 = vpop.f32.mrb[0].mxu0
      %v1081 = vadd.f32 %v324, %v1080
      %v1082 = vpop.f32.mrb[0].mxu0
      %v1083 = vpop.f32.mrb[0].mxu0
      %v1084 = vadd.f32 %v324, %v1083
      %v1085 = vpop.f32.mrb[0].mxu0
      %1086 = vmatprep.mubr.bf16.mxu0 0
      %1087 = vmatmul.mubr.bf16.gmra.mrb[0].mxu0 %v619
      %v1088 = vpop.f32.mrb[0].mxu0
      %v1089 = vadd.f32 %v324, %v1088
      %v1090 = vpop.f32.mrb[0].mxu0
      %v1091 = vpop.f32.mrb[0].mxu0
      %v1092 = vadd.f32 %v324, %v1091
      %v1093 = vpop.f32.mrb[0].mxu0
      %1094 = vmatprep.mubr.bf16.mxu0 0
      %1095 = vmatmul.mubr.bf16.gmra.mrb[0].mxu0 %v620
      %v1096 = vpop.f32.mrb[0].mxu0
      %v1097 = vadd.f32 %v324, %v1096
      %v1098 = vpop.f32.mrb[0].mxu0
      %v1099 = vpop.f32.mrb[0].mxu0
      %v1100 = vadd.f32 %v324, %v1099
      %v1101 = vpop.f32.mrb[0].mxu0
      %1102 = vmatprep.mubr.bf16.mxu0 0
      %1103 = vmatmul.mubr.bf16.gmra.mrb[0].mxu0 %v621
      %v1104 = vpop.f32.mrb[0].mxu0
      %v1105 = vadd.f32 %v324, %v1104
      %v1106 = vpop.f32.mrb[0].mxu0
      %v1107 = vpop.f32.mrb[0].mxu0
      %v1108 = vadd.f32 %v324, %v1107
      %v1109 = vpop.f32.mrb[0].mxu0
      %1110 = vmatprep.mubr.bf16.mxu0 0
      %1111 = vmatmul.mubr.bf16.gmra.mrb[0].mxu0 %v622
      %v1112 = vpop.f32.mrb[0].mxu0
      %v1113 = vadd.f32 %v324, %v1112
      %v1114 = vpop.f32.mrb[0].mxu0
      %v1115 = vpop.f32.mrb[0].mxu0
      %v1116 = vadd.f32 %v324, %v1115
      %v1117 = vpop.f32.mrb[0].mxu0
      %1118 = vmatprep.mubr.bf16.mxu0 0
      %1119 = vmatmul.mubr.bf16.gmra.mrb[0].mxu0 %v623
      %v1120 = vpop.f32.mrb[0].mxu0
      %v1121 = vadd.f32 %v324, %v1120
      %v1122 = vpop.f32.mrb[0].mxu0
      %v1123 = vpop.f32.mrb[0].mxu0
      %v1124 = vadd.f32 %v324, %v1123
      %v1125 = vpop.f32.mrb[0].mxu0
      %1126 = vmatprep.mubr.bf16.mxu0 0
      %1127 = vmatmul.mubr.bf16.gmra.mrb[0].mxu0 %v624
      %v1128 = vpop.f32.mrb[0].mxu0
      %v1129 = vadd.f32 %v324, %v1128
      %v1130 = vpop.f32.mrb[0].mxu0
      %v1131 = vpop.f32.mrb[0].mxu0
      %v1132 = vadd.f32 %v324, %v1131
      %v1133 = vpop.f32.mrb[0].mxu0
      %1134 = vmatprep.mubr.bf16.mxu0 0
      %1135 = vmatmul.mubr.bf16.gmra.mrb[0].mxu0 %v625
      %v1136 = vpop.f32.mrb[0].mxu0
      %v1137 = vadd.f32 %v324, %v1136
      %v1138 = vpop.f32.mrb[0].mxu0
      %v1139 = vpop.f32.mrb[0].mxu0
      %v1140 = vadd.f32 %v324, %v1139
      %v1141 = vpop.f32.mrb[0].mxu0
      %1142 = vmatprep.mubr.bf16.mxu0 0
      %1143 = vmatmul.mubr.bf16.gmra.mrb[0].mxu0 %v626
      %v1144 = vpop.f32.mrb[0].mxu0
      %v1145 = vadd.f32 %v324, %v1144
      %v1146 = vpop.f32.mrb[0].mxu0
      %v1147 = vpop.f32.mrb[0].mxu0
      %v1148 = vadd.f32 %v324, %v1147
      %v1149 = vpop.f32.mrb[0].mxu0
      %1150 = vmatprep.mubr.bf16.mxu0 0
      %1151 = vmatmul.mubr.bf16.gmra.mrb[0].mxu0 %v627
      %v1152 = vpop.f32.mrb[0].mxu0
      %v1153 = vadd.f32 %v324, %v1152
      %v1154 = vpop.f32.mrb[0].mxu0
      %v1155 = vpop.f32.mrb[0].mxu0
      %v1156 = vadd.f32 %v324, %v1155
      %v1157 = vpop.f32.mrb[0].mxu0
      %1158 = vmatprep.mubr.bf16.mxu0 0
      %1159 = vmatmul.mubr.bf16.gmra.mrb[0].mxu0 %v628
      %v1160 = vpop.f32.mrb[0].mxu0
      %v1161 = vadd.f32 %v324, %v1160
      %v1162 = vpop.f32.mrb[0].mxu0
      %v1163 = vpop.f32.mrb[0].mxu0
      %v1164 = vadd.f32 %v324, %v1163
      %v1165 = vpop.f32.mrb[0].mxu0
      %1166 = vmatprep.mubr.bf16.mxu0 0
      %1167 = vmatmul.mubr.bf16.gmra.mrb[0].mxu0 %v629
      %v1168 = vpop.f32.mrb[0].mxu0
      %v1169 = vadd.f32 %v324, %v1168
      %v1170 = vpop.f32.mrb[0].mxu0
      %v1171 = vpop.f32.mrb[0].mxu0
      %v1172 = vadd.f32 %v324, %v1171
      %v1173 = vpop.f32.mrb[0].mxu0
      %1174 = vmatprep.mubr.bf16.mxu0 0
      %1175 = vmatmul.mubr.bf16.gmra.mrb[0].mxu0 %v630
      %v1176 = vpop.f32.mrb[0].mxu0
      %v1177 = vadd.f32 %v324, %v1176
      %v1178 = vpop.f32.mrb[0].mxu0
      %v1179 = vpop.f32.mrb[0].mxu0
      %v1180 = vadd.f32 %v324, %v1179
      %v1181 = vpop.f32.mrb[0].mxu0
      %1182 = vmatprep.mubr.bf16.mxu0 0
      %1183 = vmatmul.mubr.bf16.gmra.mrb[0].mxu0 %v631
      %v1184 = vpop.f32.mrb[0].mxu0
      %v1185 = vadd.f32 %v324, %v1184
      %v1186 = vpop.f32.mrb[0].mxu0
      %v1187 = vpop.f32.mrb[0].mxu0
      %v1188 = vadd.f32 %v324, %v1187
      %v1189 = vpop.f32.mrb[0].mxu0
      %1190 = vmatprep.mubr.bf16.mxu0 0
      %1191 = vmatmul.mubr.bf16.gmra.mrb[0].mxu0 %v632
      %v1192 = vpop.f32.mrb[0].mxu0
      %v1193 = vadd.f32 %v324, %v1192
      %v1194 = vpop.f32.mrb[0].mxu0
      %v1195 = vpop.f32.mrb[0].mxu0
      %v1196 = vadd.f32 %v324, %v1195
      %v1197 = vpop.f32.mrb[0].mxu0
      %1198 = vmatprep.mubr.bf16.mxu0 0
      %1199 = vmatmul.mubr.bf16.gmra.mrb[0].mxu0 %v633
      %v1200 = vpop.f32.mrb[0].mxu0
      %v1201 = vadd.f32 %v324, %v1200
      %v1202 = vpop.f32.mrb[0].mxu0
      %v1203 = vpop.f32.mrb[0].mxu0
      %v1204 = vadd.f32 %v324, %v1203
      %v1205 = vpop.f32.mrb[0].mxu0
      %1206 = vmatprep.mubr.bf16.mxu0 0
      %1207 = vmatmul.mubr.bf16.gmra.mrb[0].mxu0 %v634
      %v1208 = vpop.f32.mrb[0].mxu0
      %v1209 = vadd.f32 %v324, %v1208
      %v1210 = vpop.f32.mrb[0].mxu0
      %v1211 = vpop.f32.mrb[0].mxu0
      %v1212 = vadd.f32 %v324, %v1211
      %v1213 = vpop.f32.mrb[0].mxu0
      %1214 = vmatprep.mubr.bf16.mxu0 0
      %1215 = vmatmul.mubr.bf16.gmra.mrb[0].mxu0 %v635
      %v1216 = vpop.f32.mrb[0].mxu0
      %v1217 = vadd.f32 %v324, %v1216
      %v1218 = vpop.f32.mrb[0].mxu0
      %v1219 = vpop.f32.mrb[0].mxu0
      %v1220 = vadd.f32 %v324, %v1219
      %v1221 = vpop.f32.mrb[0].mxu0
      %1222 = vmatprep.mubr.bf16.mxu0 0
      %1223 = vmatmul.mubr.bf16.gmra.mrb[0].mxu0 %v636
      %v1224 = vpop.f32.mrb[0].mxu0
      %v1225 = vadd.f32 %v324, %v1224
      %v1226 = vpop.f32.mrb[0].mxu0
      %v1227 = vpop.f32.mrb[0].mxu0
      %v1228 = vadd.f32 %v324, %v1227
      %v1229 = vpop.f32.mrb[0].mxu0
      %1230 = vmatprep.mubr.bf16.mxu0 0
      %1231 = vmatmul.mubr.bf16.gmra.mrb[0].mxu0 %v637
      %v1232 = vpop.f32.mrb[0].mxu0
      %v1233 = vadd.f32 %v324, %v1232
      %v1234 = vpop.f32.mrb[0].mxu0
      %v1235 = vpop.f32.mrb[0].mxu0
      %v1236 = vadd.f32 %v324, %v1235
      %v1237 = vpop.f32.mrb[0].mxu0
      %1238 = vmatprep.mubr.bf16.mxu0 0
      %1239 = vmatmul.mubr.bf16.gmra.mrb[0].mxu0 %v638
      %v1240 = vpop.f32.mrb[0].mxu0
      %v1241 = vadd.f32 %v324, %v1240
      %v1242 = vpop.f32.mrb[0].mxu0
      %v1243 = vpop.f32.mrb[0].mxu0
      %v1244 = vadd.f32 %v324, %v1243
      %v1245 = vpop.f32.mrb[0].mxu0
      %1246 = vmatprep.mubr.bf16.mxu0 0
      %1247 = vmatmul.mubr.bf16.gmra.mrb[0].mxu0 %v639
      %v1248 = vpop.f32.mrb[0].mxu0
      %v1249 = vadd.f32 %v324, %v1248
      %v1250 = vpop.f32.mrb[0].mxu0
      %v1251 = vpop.f32.mrb[0].mxu0
      %v1252 = vadd.f32 %v324, %v1251
      %v1253 = vpop.f32.mrb[0].mxu0
      %1254 = vmatprep.mubr.bf16.mxu0 0
      %1255 = vmatmul.mubr.bf16.gmra.mrb[0].mxu0 %v640
      %v1256 = vpop.f32.mrb[0].mxu0
      %v1257 = vadd.f32 %v324, %v1256
      %v1258 = vpop.f32.mrb[0].mxu0
      %v1259 = vpop.f32.mrb[0].mxu0
      %v1260 = vadd.f32 %v324, %v1259
      %v1261 = vpop.f32.mrb[0].mxu0
      %1262 = vmatprep.mubr.bf16.mxu0 0
      %1263 = vmatmul.mubr.bf16.gmra.mrb[0].mxu0 %v641
      %v1264 = vpop.f32.mrb[0].mxu0
      %v1265 = vadd.f32 %v324, %v1264
      %v1266 = vpop.f32.mrb[0].mxu0
      %v1267 = vpop.f32.mrb[0].mxu0
      %v1268 = vadd.f32 %v324, %v1267
      %v1269 = vpop.f32.mrb[0].mxu0
      %1270 = vmatprep.mubr.bf16.mxu0 0
      %1271 = vmatmul.mubr.bf16.gmra.mrb[0].mxu0 %v642
      %v1272 = vpop.f32.mrb[0].mxu0
      %v1273 = vadd.f32 %v324, %v1272
      %v1274 = vpop.f32.mrb[0].mxu0
      %v1275 = vpop.f32.mrb[0].mxu0
      %v1276 = vadd.f32 %v324, %v1275
      %v1277 = vpop.f32.mrb[0].mxu0
      %1278 = vmatprep.mubr.bf16.mxu0 0
      %1279 = vmatmul.mubr.bf16.gmra.mrb[0].mxu0 %v643
      %v1280 = vpop.f32.mrb[0].mxu0
      %v1281 = vadd.f32 %v324, %v1280
      %v1282 = vpop.f32.mrb[0].mxu0
      %v1283 = vpop.f32.mrb[0].mxu0
      %v1284 = vadd.f32 %v324, %v1283
      %v1285 = vpop.f32.mrb[0].mxu0
      %1286 = vmatprep.mubr.bf16.mxu0 0
      %1287 = vmatmul.mubr.bf16.gmra.mrb[0].mxu0 %v644
      %v1288 = vpop.f32.mrb[0].mxu0
      %v1289 = vadd.f32 %v324, %v1288
      %v1290 = vpop.f32.mrb[0].mxu0
      %v1291 = vpop.f32.mrb[0].mxu0
      %v1292 = vadd.f32 %v324, %v1291
      %v1293 = vpop.f32.mrb[0].mxu0
      %1294 = vmatprep.mubr.bf16.mxu0 0
      %1295 = vmatmul.mubr.bf16.gmra.mrb[0].mxu0 %v645
      %v1296 = vpop.f32.mrb[0].mxu0
      %v1297 = vadd.f32 %v324, %v1296
      %v1298 = vpop.f32.mrb[0].mxu0
      %v1299 = vpop.f32.mrb[0].mxu0
      %v1300 = vadd.f32 %v324, %v1299
      %v1301 = vpop.f32.mrb[0].mxu0
      %1302 = vdwg.mxu0
      %1303 = vst [vmem:[%s172] sm:$0xff] %v793
      %1304 = vst [vmem:[%s172 + $0x8] sm:$0xff] %v796
      %1305 = vst [vmem:[%s172 + $0x10] sm:$0xff] %v801
      %1306 = vst [vmem:[%s172 + $0x18] sm:$0xff] %v804
      %1307 = vst [vmem:[%s172 + $0x20] sm:$0xff] %v809
      %1308 = vst [vmem:[%s172 + $0x28] sm:$0xff] %v812
      %1309 = vst [vmem:[%s172 + $0x30] sm:$0xff] %v817
      %1310 = vst [vmem:[%s172 + $0x38] sm:$0xff] %v820
      %1311 = vst [vmem:[%s172 + $0x40] sm:$0xff] %v825
      %1312 = vst [vmem:[%s172 + $0x48] sm:$0xff] %v828
      %1313 = vst [vmem:[%s172 + $0x50] sm:$0xff] %v833
      %1314 = vst [vmem:[%s172 + $0x58] sm:$0xff] %v836
      %1315 = vst [vmem:[%s172 + $0x60] sm:$0xff] %v841
      %1316 = vst [vmem:[%s172 + $0x68] sm:$0xff] %v844
      %1317 = vst [vmem:[%s172 + $0x70] sm:$0xff] %v849
      %1318 = vst [vmem:[%s172 + $0x78] sm:$0xff] %v852
      %1319 = vst [vmem:[%s172 + $0x80] sm:$0xff] %v857
      %1320 = vst [vmem:[%s172 + $0x88] sm:$0xff] %v860
      %1321 = vst [vmem:[%s172 + $0x90] sm:$0xff] %v865
      %1322 = vst [vmem:[%s172 + $0x98] sm:$0xff] %v868
      %1323 = vst [vmem:[%s172 + $0xa0] sm:$0xff] %v873
      %1324 = vst [vmem:[%s172 + $0xa8] sm:$0xff] %v876
      %1325 = vst [vmem:[%s172 + $0xb0] sm:$0xff] %v881
      %1326 = vst [vmem:[%s172 + $0xb8] sm:$0xff] %v884
      %1327 = vst [vmem:[%s172 + $0xc0] sm:$0xff] %v889
      %1328 = vst [vmem:[%s172 + $0xc8] sm:$0xff] %v892
      %1329 = vst [vmem:[%s172 + $0xd0] sm:$0xff] %v897
      %1330 = vst [vmem:[%s172 + $0xd8] sm:$0xff] %v900
      %1331 = vst [vmem:[%s172 + $0xe0] sm:$0xff] %v905
      %1332 = vst [vmem:[%s172 + $0xe8] sm:$0xff] %v908
      %1333 = vst [vmem:[%s172 + $0xf0] sm:$0xff] %v913
      %1334 = vst [vmem:[%s172 + $0xf8] sm:$0xff] %v916
      %1335 = vst [vmem:[%s172 + $0x100] sm:$0xff] %v921
      %1336 = vst [vmem:[%s172 + $0x108] sm:$0xff] %v924
      %1337 = vst [vmem:[%s172 + $0x110] sm:$0xff] %v929
      %1338 = vst [vmem:[%s172 + $0x118] sm:$0xff] %v932
      %1339 = vst [vmem:[%s172 + $0x120] sm:$0xff] %v937
      %1340 = vst [vmem:[%s172 + $0x128] sm:$0xff] %v940
      %1341 = vst [vmem:[%s172 + $0x130] sm:$0xff] %v945
      %1342 = vst [vmem:[%s172 + $0x138] sm:$0xff] %v948
      %1343 = vst [vmem:[%s172 + $0x140] sm:$0xff] %v953
      %1344 = vst [vmem:[%s172 + $0x148] sm:$0xff] %v956
      %1345 = vst [vmem:[%s172 + $0x150] sm:$0xff] %v961
      %1346 = vst [vmem:[%s172 + $0x158] sm:$0xff] %v964
      %1347 = vst [vmem:[%s172 + $0x160] sm:$0xff] %v969
      %1348 = vst [vmem:[%s172 + $0x168] sm:$0xff] %v972
      %1349 = vst [vmem:[%s172 + $0x170] sm:$0xff] %v977
      %1350 = vst [vmem:[%s172 + $0x178] sm:$0xff] %v980
      %1351 = vst [vmem:[%s172 + $0x180] sm:$0xff] %v985
      %1352 = vst [vmem:[%s172 + $0x188] sm:$0xff] %v988
      %1353 = vst [vmem:[%s172 + $0x190] sm:$0xff] %v993
      %1354 = vst [vmem:[%s172 + $0x198] sm:$0xff] %v996
      %1355 = vst [vmem:[%s172 + $0x1a0] sm:$0xff] %v1001
      %1356 = vst [vmem:[%s172 + $0x1a8] sm:$0xff] %v1004
      %1357 = vst [vmem:[%s172 + $0x1b0] sm:$0xff] %v1009
      %1358 = vst [vmem:[%s172 + $0x1b8] sm:$0xff] %v1012
      %1359 = vst [vmem:[%s172 + $0x1c0] sm:$0xff] %v1017
      %1360 = vst [vmem:[%s172 + $0x1c8] sm:$0xff] %v1020
      %1361 = vst [vmem:[%s172 + $0x1d0] sm:$0xff] %v1025
      %1362 = vst [vmem:[%s172 + $0x1d8] sm:$0xff] %v1028
      %1363 = vst [vmem:[%s172 + $0x1e0] sm:$0xff] %v1033
      %1364 = vst [vmem:[%s172 + $0x1e8] sm:$0xff] %v1036
      %1365 = vst [vmem:[%s172 + $0x1f0] sm:$0xff] %v1041
      %1366 = vst [vmem:[%s172 + $0x1f8] sm:$0xff] %v1044
      %1367 = vst [vmem:[%s172 + $0x200] sm:$0xff] %v1049
      %1368 = vst [vmem:[%s172 + $0x208] sm:$0xff] %v1052
      %1369 = vst [vmem:[%s172 + $0x210] sm:$0xff] %v1057
      %1370 = vst [vmem:[%s172 + $0x218] sm:$0xff] %v1060
      %1371 = vst [vmem:[%s172 + $0x220] sm:$0xff] %v1065
      %1372 = vst [vmem:[%s172 + $0x228] sm:$0xff] %v1068
      %1373 = vst [vmem:[%s172 + $0x230] sm:$0xff] %v1073
      %1374 = vst [vmem:[%s172 + $0x238] sm:$0xff] %v1076
      %1375 = vst [vmem:[%s172 + $0x240] sm:$0xff] %v1081
      %1376 = vst [vmem:[%s172 + $0x248] sm:$0xff] %v1084
      %1377 = vst [vmem:[%s172 + $0x250] sm:$0xff] %v1089
      %1378 = vst [vmem:[%s172 + $0x258] sm:$0xff] %v1092
      %1379 = vst [vmem:[%s172 + $0x260] sm:$0xff] %v1097
      %1380 = vst [vmem:[%s172 + $0x268] sm:$0xff] %v1100
      %1381 = vst [vmem:[%s172 + $0x270] sm:$0xff] %v1105
      %1382 = vst [vmem:[%s172 + $0x278] sm:$0xff] %v1108
      %1383 = vst [vmem:[%s172 + $0x280] sm:$0xff] %v1113
      %1384 = vst [vmem:[%s172 + $0x288] sm:$0xff] %v1116
      %1385 = vst [vmem:[%s172 + $0x290] sm:$0xff] %v1121
      %1386 = vst [vmem:[%s172 + $0x298] sm:$0xff] %v1124
      %1387 = vst [vmem:[%s172 + $0x2a0] sm:$0xff] %v1129
      %1388 = vst [vmem:[%s172 + $0x2a8] sm:$0xff] %v1132
      %1389 = vst [vmem:[%s172 + $0x2b0] sm:$0xff] %v1137
      %1390 = vst [vmem:[%s172 + $0x2b8] sm:$0xff] %v1140
      %1391 = vst [vmem:[%s172 + $0x2c0] sm:$0xff] %v1145
      %1392 = vst [vmem:[%s172 + $0x2c8] sm:$0xff] %v1148
      %1393 = vst [vmem:[%s172 + $0x2d0] sm:$0xff] %v1153
      %1394 = vst [vmem:[%s172 + $0x2d8] sm:$0xff] %v1156
      %1395 = vst [vmem:[%s172 + $0x2e0] sm:$0xff] %v1161
      %1396 = vst [vmem:[%s172 + $0x2e8] sm:$0xff] %v1164
      %1397 = vst [vmem:[%s172 + $0x2f0] sm:$0xff] %v1169
      %1398 = vst [vmem:[%s172 + $0x2f8] sm:$0xff] %v1172
      %1399 = vst [vmem:[%s172 + $0x300] sm:$0xff] %v1177
      %1400 = vst [vmem:[%s172 + $0x308] sm:$0xff] %v1180
      %1401 = vst [vmem:[%s172 + $0x310] sm:$0xff] %v1185
      %1402 = vst [vmem:[%s172 + $0x318] sm:$0xff] %v1188
      %1403 = vst [vmem:[%s172 + $0x320] sm:$0xff] %v1193
      %1404 = vst [vmem:[%s172 + $0x328] sm:$0xff] %v1196
      %1405 = vst [vmem:[%s172 + $0x330] sm:$0xff] %v1201
      %1406 = vst [vmem:[%s172 + $0x338] sm:$0xff] %v1204
      %1407 = vst [vmem:[%s172 + $0x340] sm:$0xff] %v1209
      %1408 = vst [vmem:[%s172 + $0x348] sm:$0xff] %v1212
      %1409 = vst [vmem:[%s172 + $0x350] sm:$0xff] %v1217
      %1410 = vst [vmem:[%s172 + $0x358] sm:$0xff] %v1220
      %1411 = vst [vmem:[%s172 + $0x360] sm:$0xff] %v1225
      %1412 = vst [vmem:[%s172 + $0x368] sm:$0xff] %v1228
      %1413 = vst [vmem:[%s172 + $0x370] sm:$0xff] %v1233
      %1414 = vst [vmem:[%s172 + $0x378] sm:$0xff] %v1236
      %1415 = vst [vmem:[%s172 + $0x380] sm:$0xff] %v1241
      %1416 = vst [vmem:[%s172 + $0x388] sm:$0xff] %v1244
      %1417 = vst [vmem:[%s172 + $0x390] sm:$0xff] %v1249
      %1418 = vst [vmem:[%s172 + $0x398] sm:$0xff] %v1252
      %1419 = vst [vmem:[%s172 + $0x3a0] sm:$0xff] %v1257
      %1420 = vst [vmem:[%s172 + $0x3a8] sm:$0xff] %v1260
      %1421 = vst [vmem:[%s172 + $0x3b0] sm:$0xff] %v1265
      %1422 = vst [vmem:[%s172 + $0x3b8] sm:$0xff] %v1268
      %1423 = vst [vmem:[%s172 + $0x3c0] sm:$0xff] %v1273
      %1424 = vst [vmem:[%s172 + $0x3c8] sm:$0xff] %v1276
      %1425 = vst [vmem:[%s172 + $0x3d0] sm:$0xff] %v1281
      %1426 = vst [vmem:[%s172 + $0x3d8] sm:$0xff] %v1284
      %1427 = vst [vmem:[%s172 + $0x3e0] sm:$0xff] %v1289
      %1428 = vst [vmem:[%s172 + $0x3e8] sm:$0xff] %v1292
      %1429 = vst [vmem:[%s172 + $0x3f0] sm:$0xff] %v1297
      %1430 = vst [vmem:[%s172 + $0x3f8] sm:$0xff] %v1300
      %s1431 = smul.u32 128, %s14
      %p1432 = scmp.lt.s32.totalorder %s1431, 511
      %s1433 = scalar_select %p1432, %s1431, 511
      %s1434 = smul.addr %s1433, 8
      %s1435 = scalar_lea.vmem %s3, %s1434
      // Predicated region
      $region33: #{convin_lstm_forward.1} parent=31 // pred_check
        %p1436 = pneg %p100
      $region34: #{convin_lstm_forward.1} parent=31 // pred_check_branch
        %1438 = sbr.rel (%p1436) target = $region36
      $region35: #{convin_lstm_forward.1} parent=31 // pred_region
        %s1439 = smul.u32 128, %s14
      $region36: #{convin_lstm_forward.1} parent=31 // pred_fallthru
        _
    $region32: #{convin_lstm_forward.1} parent=5 // pred_fallthru
      _
    %p1440 = scmp.le.s32.totalorder 2, %s9
    // Predicated region
    $region37: #{convin_lstm_forward.1} parent=5 // pred_check
      %p1441 = pneg %p1440
    $region38: #{convin_lstm_forward.1} parent=5 // pred_check_branch
      %1443 = sbr.rel (%p1441) target = $region40
    $region39: #{convin_lstm_forward.1} parent=5 // pred_region
      %s1444 = ssub.s32 %s9, 2
      // Predicated region
      $region41: #{convin_lstm_forward.1} parent=39 // pred_check
        %p1445 = pneg %p106
      $region42: #{convin_lstm_forward.1} parent=39 // pred_check_branch
        %1447 = sbr.rel (%p1445) target = $region44
      $region43: #{convin_lstm_forward.1} parent=39 // pred_region
        %s1448 = smul.u32 128, %s15
        %p1449 = scmp.lt.s32.totalorder %s1448, 511
        %s1450 = scalar_select %p1449, %s1448, 511
        %s1451 = smul.addr %s1450, 8
        %s1452 = scalar_lea.vmem %s3, %s1451
      $region44: #{convin_lstm_forward.1} parent=39 // pred_fallthru
        _
    $region40: #{convin_lstm_forward.1} parent=5 // pred_fallthru
      _
  $region6: #{convin_lstm_forward.1} parent=0 // loop_footer
    %s13 = sadd.s32 1, %s9
  $region7: #{convin_lstm_forward.1} parent=0 // loop_footer_branch
    %8 = sbr.rel target = $region3
  $region8: #{convin_lstm_forward.1} parent=0 // loop_exit
    _

</llo_original>
